<compile_context>
chip_gen: v6e
topology: v6e:2x2x1
jax: 0.10.0
libtpu: 0.0.40
codegen_flags: <defaults>
</compile_context>

<pallas_src>
import math
import functools

import jax
import jax.numpy as jnp
from jax import lax
from jax.experimental import pallas as pl
from jax.experimental.pallas import tpu as pltpu


def _round_up(x, m):
    return (x + m - 1) // m * m


def _aam_softmax_kernel(emb_ref, w_ref, lab_ref, out_ref,
                        embn_scr, m_scr, l_scr, t_scr,
                        *, cos_m, sin_m, th, mm, scale, easy_margin,
                        num_classes, tile_c, mask_cols):
    c = pl.program_id(1)
    nc = pl.num_programs(1)

    # ---- init (once per batch tile, at the first class tile) ---------------
    @pl.when(c == 0)
    def _init():
        emb = emb_ref[...].astype(jnp.float32)                    # (TB, D)
        # F.normalize(p=2, dim=1, eps=1e-12):  x * rsqrt(max(sum(x^2), eps^2))
        inv = lax.rsqrt(jnp.maximum(jnp.sum(emb * emb, axis=1, keepdims=True),
                                    1e-24))
        embn_scr[...] = (emb * inv).astype(embn_scr.dtype)
        m_scr[...] = jnp.full(m_scr.shape, -jnp.inf, dtype=jnp.float32)
        l_scr[...] = jnp.zeros(l_scr.shape, dtype=jnp.float32)
        t_scr[...] = jnp.zeros(t_scr.shape, dtype=jnp.float32)

    # ---- normalize the current weight tile (f32 math, native matmul dtype) -
    w = w_ref[...].astype(jnp.float32)                            # (TC, D)
    inv_w = lax.rsqrt(jnp.maximum(jnp.sum(w * w, axis=1, keepdims=True), 1e-24))
    w_n = (w * inv_w).astype(w_ref.dtype)

    # cosine = emb_n @ w_n.T without transposing the (TC, D) weight tile:
    # contract dim 1 (D) of emb_n against dim 1 (D) of w_n.
    cosine = lax.dot_general(
        embn_scr[...], w_n,
        dimension_numbers=(((1,), (1,)), ((), ())),
        preferred_element_type=jnp.float32)                       # (TB, TC) f32

    # ---- additive angular margin (all post-matmul math in f32) -------------
    sine = jnp.sqrt(jnp.clip(1.0 - cosine * cosine, 0.0, 1.0))
    phi = cosine * cos_m - sine * sin_m
    if easy_margin:
        phi = jnp.where(cosine > 0.0, phi, cosine)
    else:
        phi = jnp.where(cosine > th, phi, cosine - mm)

    labels = lab_ref[...]                                         # (TB, 1) i32
    col = (jax.lax.broadcasted_iota(jnp.int32, cosine.shape, 1)
           + c * tile_c)                                          # global class id
    one_hot = col == labels                                       # (TB, TC) bool

    logits = jnp.where(one_hot, phi, cosine) * scale
    if mask_cols:
        # Padded class columns must not contribute to the LSE.
        logits = jnp.where(col < num_classes, logits, -jnp.inf)

    # ---- online log-sum-exp + target-logit accumulation --------------------
    t_scr[...] += jnp.sum(jnp.where(one_hot, logits, 0.0), axis=1, keepdims=True)
    m_new = jnp.maximum(m_scr[...], jnp.max(logits, axis=1, keepdims=True))
    l_scr[...] = (jnp.exp(m_scr[...] - m_new) * l_scr[...]
                  + jnp.sum(jnp.exp(logits - m_new), axis=1, keepdims=True))
    m_scr[...] = m_new

    # ---- epilogue: per-row loss = LSE - target_logit ------------------------
    @pl.when(c == nc - 1)
    def _finalize():
        out_ref[...] = m_scr[...] + jnp.log(l_scr[...]) - t_scr[...]


def aam_softmax_loss(embeddings, weight, labels,
                     margin=0.2, scale=30.0, easy_margin=False,
                     max_tile_b=128, max_tile_c=1024):
    B, D = embeddings.shape
    C, D2 = weight.shape
    assert D == D2

    # Tile sizes (sublane-aligned; sized well under the 64 MiB v7x VMEM even
    # double-buffered for realistic D / class counts).
    TILE_B = min(_round_up(B, 8), max_tile_b)
    B_pad = _round_up(B, TILE_B)
    TILE_C = min(_round_up(C, 8), max_tile_c)
    C_pad = _round_up(C, TILE_C)

    if B_pad != B:
        embeddings = jnp.pad(embeddings, ((0, B_pad - B), (0, 0)))
        labels = jnp.pad(labels, (0, B_pad - B))
    if C_pad != C:
        weight = jnp.pad(weight, ((0, C_pad - C), (0, 0)))

    labels2d = labels.astype(jnp.int32).reshape(B_pad, 1)

    cos_m = math.cos(margin)
    sin_m = math.sin(margin)
    th = math.cos(math.pi - margin)
    mm = math.sin(math.pi - margin) * margin

    kernel = functools.partial(
        _aam_softmax_kernel,
        cos_m=cos_m, sin_m=sin_m, th=th, mm=mm,
        scale=scale, easy_margin=easy_margin,
        num_classes=C, tile_c=TILE_C, mask_cols=(C_pad != C))

    grid = (B_pad // TILE_B, C_pad // TILE_C)

    per_row = pl.pallas_call(
        kernel,
        out_shape=jax.ShapeDtypeStruct((B_pad, 1), jnp.float32),
        grid=grid,
        in_specs=[
            pl.BlockSpec((TILE_B, D), lambda b, c: (b, 0)),   # embeddings (resident per batch tile)
            pl.BlockSpec((TILE_C, D), lambda b, c: (c, 0)),   # streamed weight tiles
            pl.BlockSpec((TILE_B, 1), lambda b, c: (b, 0)),   # labels
        ],
        out_specs=pl.BlockSpec((TILE_B, 1), lambda b, c: (b, 0)),
        scratch_shapes=[
            pltpu.VMEM((TILE_B, D), embeddings.dtype),        # normalized embeddings
            pltpu.VMEM((TILE_B, 1), jnp.float32),             # running max
            pltpu.VMEM((TILE_B, 1), jnp.float32),             # running sum-exp
            pltpu.VMEM((TILE_B, 1), jnp.float32),             # target logit
        ],
        compiler_params=pltpu.CompilerParams(
            dimension_semantics=("parallel", "arbitrary"),
            vmem_limit_bytes=64 * 1024 * 1024),
    )(embeddings, weight, labels2d)

    return jnp.mean(per_row[:B, 0])


def reference_loss(embeddings, weight, labels,
                   margin=0.2, scale=30.0, easy_margin=False):
    # Pure-JAX reference for a sanity check.
    cos_m = math.cos(margin)
    sin_m = math.sin(margin)
    th = math.cos(math.pi - margin)
    mm = math.sin(math.pi - margin) * margin
    e = embeddings / jnp.maximum(
        jnp.linalg.norm(embeddings, axis=1, keepdims=True), 1e-12)
    w = weight / jnp.maximum(
        jnp.linalg.norm(weight, axis=1, keepdims=True), 1e-12)
    cosine = e @ w.T
    sine = jnp.sqrt(jnp.clip(1.0 - cosine ** 2, 0.0, 1.0))
    phi = cosine * cos_m - sine * sin_m
    phi = jnp.where(cosine > 0, phi, cosine) if easy_margin else \
        jnp.where(cosine > th, phi, cosine - mm)
    one_hot = jax.nn.one_hot(labels, cosine.shape[1], dtype=cosine.dtype)
    logits = (one_hot * phi + (1.0 - one_hot) * cosine) * scale
    logp = jax.nn.log_softmax(logits, axis=1)
    return -jnp.mean(jnp.sum(one_hot * logp, axis=1))


if __name__ == "__main__":
    # Module config: embedding_dim=32, num_classes=16; batch=8.
    embedding_dim = 32
    num_classes = 16
    batch = 8

    key = jax.random.PRNGKey(0)
    k_emb, k_w, k_lab = jax.random.split(key, 3)

    embeddings = jax.random.normal(k_emb, (batch, embedding_dim), jnp.float32)

    # Deterministic Xavier-normal init for the weight parameter (C, D):
    # std = sqrt(2 / (fan_in + fan_out)) = sqrt(2 / (D + C)).
    xavier_std = math.sqrt(2.0 / (embedding_dim + num_classes))
    weight = xavier_std * jax.random.normal(
        k_w, (num_classes, embedding_dim), jnp.float32)

    labels = jax.random.randint(k_lab, (batch,), 0, num_classes, jnp.int32)

    loss = aam_softmax_loss(embeddings, weight, labels)
    loss = jax.block_until_ready(loss)

    ref = reference_loss(embeddings, weight, labels)
    assert jnp.allclose(loss, ref, atol=1e-4, rtol=1e-4), (loss, ref)

    print("KERNEL_OK")
</pallas_src>

<mosaic_0001>
module attributes {stable_mosaic.version = 11 : i64} {
  func.func @_aam_softmax_kernel(%arg0: i32, %arg1: i32, %arg2: memref<8x32xf32, #tpu.memory_space<vmem>>, %arg3: memref<16x32xf32, #tpu.memory_space<vmem>>, %arg4: memref<8x1xi32, #tpu.memory_space<vmem>>, %arg5: memref<8x1xf32, #tpu.memory_space<vmem>>, %arg6: memref<8x32xf32, #tpu.memory_space<vmem>>, %arg7: memref<8x1xf32, #tpu.memory_space<vmem>>, %arg8: memref<8x1xf32, #tpu.memory_space<vmem>>, %arg9: memref<8x1xf32, #tpu.memory_space<vmem>>) attributes {dimension_semantics = [#tpu.dimension_semantics<parallel>, #tpu.dimension_semantics<arbitrary>], iteration_bounds = array<i64: 1, 1>, scalar_prefetch = 0 : i64, scratch_operands = 4 : i64, tpu.core_type = #tpu.core_type<tc>, window_params = [{transform_indices = @transform_0, window_bounds = array<i64: 8, 32>}, {transform_indices = @transform_1, window_bounds = array<i64: 16, 32>}, {transform_indices = @transform_2, window_bounds = array<i64: 8, 1>}, {transform_indices = @transform_3, window_bounds = array<i64: 8, 1>}]} {
    %c0_i32 = arith.constant 0 : i32
    %0 = arith.cmpi eq, %arg1, %c0_i32 : i32
    %1 = arith.extui %0 : i1 to i32
    %c0_i32_0 = arith.constant 0 : i32
    %2 = arith.cmpi ne, %1, %c0_i32_0 : i32
    scf.if %2 {
      %c0_36 = arith.constant 0 : index
      %c0_37 = arith.constant 0 : index
      %69 = vector.load %arg2[%c0_36, %c0_37] : memref<8x32xf32, #tpu.memory_space<vmem>>, vector<8x32xf32>
      %70 = arith.mulf %69, %69 : vector<8x32xf32>
      %cst_38 = arith.constant dense<0.000000e+00> : vector<8xf32>
      %71 = vector.multi_reduction <add>, %70, %cst_38 [1] : vector<8x32xf32> to vector<8xf32>
      %72 = vector.shape_cast %71 : vector<8xf32> to vector<8x1xf32>
      %cst_39 = arith.constant 1.000000e-24 : f32
      %73 = vector.broadcast %cst_39 : f32 to vector<8x1xf32>
      %74 = arith.maximumf %72, %73 : vector<8x1xf32>
      %75 = math.rsqrt %74 : vector<8x1xf32>
      %76 = vector.broadcast %75 : vector<8x1xf32> to vector<8x32xf32>
      %77 = arith.mulf %69, %76 : vector<8x32xf32>
      %c0_40 = arith.constant 0 : index
      %c0_41 = arith.constant 0 : index
      %78 = vector.load %arg6[%c0_40, %c0_41] : memref<8x32xf32, #tpu.memory_space<vmem>>, vector<8x32xf32>
      tpu.vector_store %arg6[%c0_40, %c0_41], %77 {strides = array<i32>} : memref<8x32xf32, #tpu.memory_space<vmem>>, vector<8x32xf32>,
      %cst_42 = arith.constant 0xFF800000 : f32
      %79 = vector.broadcast %cst_42 : f32 to vector<8x1xf32>
      %c0_43 = arith.constant 0 : index
      %c0_44 = arith.constant 0 : index
      %80 = vector.load %arg7[%c0_43, %c0_44] : memref<8x1xf32, #tpu.memory_space<vmem>>, vector<8x1xf32>
      tpu.vector_store %arg7[%c0_43, %c0_44], %79 {strides = array<i32>} : memref<8x1xf32, #tpu.memory_space<vmem>>, vector<8x1xf32>,
      %cst_45 = arith.constant 0.000000e+00 : f32
      %81 = vector.broadcast %cst_45 : f32 to vector<8x1xf32>
      %c0_46 = arith.constant 0 : index
      %c0_47 = arith.constant 0 : index
      %82 = vector.load %arg8[%c0_46, %c0_47] : memref<8x1xf32, #tpu.memory_space<vmem>>, vector<8x1xf32>
      tpu.vector_store %arg8[%c0_46, %c0_47], %81 {strides = array<i32>} : memref<8x1xf32, #tpu.memory_space<vmem>>, vector<8x1xf32>,
      %cst_48 = arith.constant 0.000000e+00 : f32
      %83 = vector.broadcast %cst_48 : f32 to vector<8x1xf32>
      %c0_49 = arith.constant 0 : index
      %c0_50 = arith.constant 0 : index
      %84 = vector.load %arg9[%c0_49, %c0_50] : memref<8x1xf32, #tpu.memory_space<vmem>>, vector<8x1xf32>
      tpu.vector_store %arg9[%c0_49, %c0_50], %83 {strides = array<i32>} : memref<8x1xf32, #tpu.memory_space<vmem>>, vector<8x1xf32>,
    } else {
    }
    %c0 = arith.constant 0 : index
    %c0_1 = arith.constant 0 : index
    %3 = vector.load %arg3[%c0, %c0_1] : memref<16x32xf32, #tpu.memory_space<vmem>>, vector<16x32xf32>
    %4 = arith.mulf %3, %3 : vector<16x32xf32>
    %cst = arith.constant dense<0.000000e+00> : vector<16xf32>
    %5 = vector.multi_reduction <add>, %4, %cst [1] : vector<16x32xf32> to vector<16xf32>
    %6 = vector.shape_cast %5 : vector<16xf32> to vector<16x1xf32>
    %cst_2 = arith.constant 1.000000e-24 : f32
    %7 = vector.broadcast %cst_2 : f32 to vector<16x1xf32>
    %8 = arith.maximumf %6, %7 : vector<16x1xf32>
    %9 = math.rsqrt %8 : vector<16x1xf32>
    %10 = vector.broadcast %9 : vector<16x1xf32> to vector<16x32xf32>
    %11 = arith.mulf %3, %10 : vector<16x32xf32>
    %c0_3 = arith.constant 0 : index
    %c0_4 = arith.constant 0 : index
    %12 = vector.load %arg6[%c0_3, %c0_4] : memref<8x32xf32, #tpu.memory_space<vmem>>, vector<8x32xf32>
    %cst_5 = arith.constant dense<0.000000e+00> : vector<8x16xf32>
    %13 = tpu.matmul %12, %11, %cst_5 {dimension_numbers = #tpu.dot_dimension_numbers<[1], [1], [0], [0], [0, 0, 1, 0], [], []>} : vector<8x32xf32>, vector<16x32xf32>, vector<8x16xf32> -> vector<8x16xf32>
    %14 = arith.mulf %13, %13 : vector<8x16xf32>
    %cst_6 = arith.constant 1.000000e+00 : f32
    %15 = vector.broadcast %cst_6 : f32 to vector<8x16xf32>
    %16 = arith.subf %15, %14 : vector<8x16xf32>
    %cst_7 = arith.constant 0.000000e+00 : f32
    %cst_8 = arith.constant 1.000000e+00 : f32
    %17 = vector.broadcast %cst_7 : f32 to vector<8x16xf32>
    %18 = arith.maximumf %17, %16 : vector<8x16xf32>
    %19 = vector.broadcast %cst_8 : f32 to vector<8x16xf32>
    %20 = arith.minimumf %19, %18 : vector<8x16xf32>
    %21 = math.sqrt %20 : vector<8x16xf32>
    %cst_9 = arith.constant 0.980066597 : f32
    %22 = vector.broadcast %cst_9 : f32 to vector<8x16xf32>
    %23 = arith.mulf %13, %22 : vector<8x16xf32>
    %cst_10 = arith.constant 0.198669329 : f32
    %24 = vector.broadcast %cst_10 : f32 to vector<8x16xf32>
    %25 = arith.mulf %21, %24 : vector<8x16xf32>
    %26 = arith.subf %23, %25 : vector<8x16xf32>
    %cst_11 = arith.constant -0.980066597 : f32
    %27 = vector.broadcast %cst_11 : f32 to vector<8x16xf32>
    %28 = arith.cmpf ogt, %13, %27 : vector<8x16xf32>
    %cst_12 = arith.constant 0.0397338644 : f32
    %29 = vector.broadcast %cst_12 : f32 to vector<8x16xf32>
    %30 = arith.subf %13, %29 : vector<8x16xf32>
    %31 = arith.select %28, %26, %30 : vector<8x16xi1>, vector<8x16xf32>
    %c0_13 = arith.constant 0 : index
    %c0_14 = arith.constant 0 : index
    %32 = vector.load %arg4[%c0_13, %c0_14] : memref<8x1xi32, #tpu.memory_space<vmem>>, vector<8x1xi32>
    %33 = tpu.iota {dimensions = array<i32: 1>} : vector<8x16xi32>
    %c16_i32 = arith.constant 16 : i32
    %34 = arith.muli %arg1, %c16_i32 : i32
    %35 = vector.broadcast %34 : i32 to vector<8x16xi32>
    %36 = arith.addi %33, %35 : vector<8x16xi32>
    %37 = vector.broadcast %32 : vector<8x1xi32> to vector<8x16xi32>
    %38 = arith.cmpi eq, %36, %37 : vector<8x16xi32>
    %39 = arith.select %38, %31, %13 : vector<8x16xi1>, vector<8x16xf32>
    %cst_15 = arith.constant 3.000000e+01 : f32
    %40 = vector.broadcast %cst_15 : f32 to vector<8x16xf32>
    %41 = arith.mulf %39, %40 : vector<8x16xf32>
    %c0_16 = arith.constant 0 : index
    %c0_17 = arith.constant 0 : index
    %42 = vector.load %arg9[%c0_16, %c0_17] : memref<8x1xf32, #tpu.memory_space<vmem>>, vector<8x1xf32>
    %cst_18 = arith.constant 0.000000e+00 : f32
    %43 = vector.broadcast %cst_18 : f32 to vector<8x16xf32>
    %44 = arith.select %38, %41, %43 : vector<8x16xi1>, vector<8x16xf32>
    %cst_19 = arith.constant dense<0.000000e+00> : vector<8xf32>
    %45 = vector.multi_reduction <add>, %44, %cst_19 [1] : vector<8x16xf32> to vector<8xf32>
    %46 = vector.shape_cast %45 : vector<8xf32> to vector<8x1xf32>
    %47 = arith.addf %42, %46 : vector<8x1xf32>
    %c0_20 = arith.constant 0 : index
    %c0_21 = arith.constant 0 : index
    %48 = vector.load %arg9[%c0_20, %c0_21] : memref<8x1xf32, #tpu.memory_space<vmem>>, vector<8x1xf32>
    tpu.vector_store %arg9[%c0_20, %c0_21], %47 {strides = array<i32>} : memref<8x1xf32, #tpu.memory_space<vmem>>, vector<8x1xf32>,
    %c0_22 = arith.constant 0 : index
    %c0_23 = arith.constant 0 : index
    %49 = vector.load %arg7[%c0_22, %c0_23] : memref<8x1xf32, #tpu.memory_space<vmem>>, vector<8x1xf32>
    %cst_24 = arith.constant dense<0xFF800000> : vector<8xf32>
    %50 = vector.multi_reduction <maximumf>, %41, %cst_24 [1] : vector<8x16xf32> to vector<8xf32>
    %51 = vector.shape_cast %50 : vector<8xf32> to vector<8x1xf32>
    %52 = arith.maximumf %49, %51 : vector<8x1xf32>
    %c0_25 = arith.constant 0 : index
    %c0_26 = arith.constant 0 : index
    %53 = vector.load %arg7[%c0_25, %c0_26] : memref<8x1xf32, #tpu.memory_space<vmem>>, vector<8x1xf32>
    %54 = arith.subf %53, %52 : vector<8x1xf32>
    %55 = math.exp %54 : vector<8x1xf32>
    %c0_27 = arith.constant 0 : index
    %c0_28 = arith.constant 0 : index
    %56 = vector.load %arg8[%c0_27, %c0_28] : memref<8x1xf32, #tpu.memory_space<vmem>>, vector<8x1xf32>
    %57 = arith.mulf %55, %56 : vector<8x1xf32>
    %58 = vector.broadcast %52 : vector<8x1xf32> to vector<8x16xf32>
    %59 = arith.subf %41, %58 : vector<8x16xf32>
    %60 = math.exp %59 : vector<8x16xf32>
    %cst_29 = arith.constant dense<0.000000e+00> : vector<8xf32>
    %61 = vector.multi_reduction <add>, %60, %cst_29 [1] : vector<8x16xf32> to vector<8xf32>
    %62 = vector.shape_cast %61 : vector<8xf32> to vector<8x1xf32>
    %63 = arith.addf %57, %62 : vector<8x1xf32>
    %c0_30 = arith.constant 0 : index
    %c0_31 = arith.constant 0 : index
    %64 = vector.load %arg8[%c0_30, %c0_31] : memref<8x1xf32, #tpu.memory_space<vmem>>, vector<8x1xf32>
    tpu.vector_store %arg8[%c0_30, %c0_31], %63 {strides = array<i32>} : memref<8x1xf32, #tpu.memory_space<vmem>>, vector<8x1xf32>,
    %c0_32 = arith.constant 0 : index
    %c0_33 = arith.constant 0 : index
    %65 = vector.load %arg7[%c0_32, %c0_33] : memref<8x1xf32, #tpu.memory_space<vmem>>, vector<8x1xf32>
    tpu.vector_store %arg7[%c0_32, %c0_33], %52 {strides = array<i32>} : memref<8x1xf32, #tpu.memory_space<vmem>>, vector<8x1xf32>,
    %c0_i32_34 = arith.constant 0 : i32
    %66 = arith.cmpi eq, %arg1, %c0_i32_34 : i32
    %67 = arith.extui %66 : i1 to i32
    %c0_i32_35 = arith.constant 0 : i32
    %68 = arith.cmpi ne, %67, %c0_i32_35 : i32
    scf.if %68 {
      %c0_36 = arith.constant 0 : index
      %c0_37 = arith.constant 0 : index
      %69 = vector.load %arg7[%c0_36, %c0_37] : memref<8x1xf32, #tpu.memory_space<vmem>>, vector<8x1xf32>
      %c0_38 = arith.constant 0 : index
      %c0_39 = arith.constant 0 : index
      %70 = vector.load %arg8[%c0_38, %c0_39] : memref<8x1xf32, #tpu.memory_space<vmem>>, vector<8x1xf32>
      %71 = math.log %70 : vector<8x1xf32>
      %72 = arith.addf %69, %71 : vector<8x1xf32>
      %c0_40 = arith.constant 0 : index
      %c0_41 = arith.constant 0 : index
      %73 = vector.load %arg9[%c0_40, %c0_41] : memref<8x1xf32, #tpu.memory_space<vmem>>, vector<8x1xf32>
      %74 = arith.subf %72, %73 : vector<8x1xf32>
      %c0_42 = arith.constant 0 : index
      %c0_43 = arith.constant 0 : index
      %75 = vector.load %arg5[%c0_42, %c0_43] : memref<8x1xf32, #tpu.memory_space<vmem>>, vector<8x1xf32>
      tpu.vector_store %arg5[%c0_42, %c0_43], %74 {strides = array<i32>} : memref<8x1xf32, #tpu.memory_space<vmem>>, vector<8x1xf32>,
    } else {
    }
    return
  }
  func.func @transform_0(%arg0: i32, %arg1: i32) -> (i32, i32) {
    %c0_i32 = arith.constant 0 : i32
    %c0_i32_0 = arith.constant 0 : i32
    return %arg0, %c0_i32 : i32, i32
  }
  func.func @transform_1(%arg0: i32, %arg1: i32) -> (i32, i32) {
    %c0_i32 = arith.constant 0 : i32
    %c0_i32_0 = arith.constant 0 : i32
    return %arg1, %c0_i32 : i32, i32
  }
  func.func @transform_2(%arg0: i32, %arg1: i32) -> (i32, i32) {
    %c0_i32 = arith.constant 0 : i32
    %c0_i32_0 = arith.constant 0 : i32
    return %arg0, %c0_i32 : i32, i32
  }
  func.func @transform_3(%arg0: i32, %arg1: i32) -> (i32, i32) {
    %c0_i32 = arith.constant 0 : i32
    %c0_i32_0 = arith.constant 0 : i32
    return %arg0, %c0_i32 : i32, i32
  }
}

</mosaic_0001>

<llo_original>
// kernel: tpu_custom_call.1
$region0: #{tpu_custom_call.1}
  #allocation0 [shape = 'u32[]', space=smem, size = 0x4, offset = 0x4, fixed_abs, tag = 'smem constant byte address 0x4 - core index']
  #allocation1 [shape = 'u32[144,128]{1,0:T(1,128)}', space=vmem, size = 0x12000, scoped, tag = 'internal scratch']
  #allocation2 [shape = 'f32[8,32]{1,0:T(8,128)}', space=vmem, size = 0x1000, scoped, tag = 'scratch operand']
  #allocation3 [shape = 'f32[8,1]{1,0:T(8,128)}', space=vmem, size = 0x1000, scoped, tag = 'scratch operand']
  #allocation4 [shape = 'f32[8,1]{1,0:T(8,128)}', space=vmem, size = 0x1000, scoped, tag = 'scratch operand']
  #allocation5 [shape = 'f32[8,1]{1,0:T(8,128)}', space=vmem, size = 0x1000, scoped, tag = 'scratch operand']
  %s0 = inlined_call_operand.vmem [shape: f32[8,32], index: 0, kind: input, shape index: {}]
  %s1 = inlined_call_operand.hbm [shape: f32[16,32], index: 1, kind: input, shape index: {}]
  %s2 = inlined_call_operand.vmem [shape: s32[8,1], index: 2, kind: input, shape index: {}]
  %s3 = inlined_call_operand.vmem [shape: f32[8,1], index: 3, kind: output, shape index: {}]
  %s4 = sld [smem:[#allocation0]]
  $region34: #{tpu_custom_call.1} parent=0
    _
  %s6 = ssub.s32 1, %s4
  %s7 = scalar_select 0, %s6, %s4
  $region1: #{tpu_custom_call.1} parent=0
    #allocation6 [shape = 'u8[8192]{0}', space=vmem, size = 0x2000, scoped, tag = 'input window, operand 1, single buffered']
    #allocation7 [shape = 's32[1]{0}', space=sflag, size = 0x4, scoped, tag = 'scoped memory for tpu_custom_call.1']
    %8 = vsyncpa [#allocation7], 0
    // Predicated region
    $region2: #{tpu_custom_call.1} parent=1 // pred_check
      _
    $region3: #{tpu_custom_call.1} parent=1 // pred_check_branch
      %10 = sbr.rel (0) target = $region5
    $region4: #{tpu_custom_call.1} parent=1 // pred_region
      _
    $region5: #{tpu_custom_call.1} parent=1 // pred_fallthru
      _
    // Predicated region
    $region6: #{tpu_custom_call.1} parent=1 // pred_check
      _
    $region7: #{tpu_custom_call.1} parent=1 // pred_check_branch
      %12 = sbr.rel (0) target = $region9
    $region8: #{tpu_custom_call.1} parent=1 // pred_region
      %s14 = ssub.s32 256, 256
      %15 = vsyncadd [#allocation7], %s14
      %s16 = sshll.u32 [#allocation6], 4
      %s17 = int_to_ptr.vmem [resolvable:$true] %s16
      %22 = dma.hbm_to_vmem [thread:$0]  %s1, 256, %s17, [#allocation7], 128, 128, 8
    $region9: #{tpu_custom_call.1} parent=1 // pred_fallthru
      _
    // Predicated region
    $region10: #{tpu_custom_call.1} parent=1 // pred_check
      _
    $region11: #{tpu_custom_call.1} parent=1 // pred_check_branch
      %24 = sbr.rel (0) target = $region13
    $region12: #{tpu_custom_call.1} parent=1 // pred_region
      _
    $region13: #{tpu_custom_call.1} parent=1 // pred_fallthru
      _
    // Predicated region
    $region14: #{tpu_custom_call.1} parent=1 // pred_check
      _
    $region15: #{tpu_custom_call.1} parent=1 // pred_check_branch
      %26 = sbr.rel (0) target = $region17
    $region16: #{tpu_custom_call.1} parent=1 // pred_region
      %27 = dma.done [#allocation7], 256
    $region17: #{tpu_custom_call.1} parent=1 // pred_fallthru
      _
    %p28 = scmp.eq.s32.totalorder 0, 0
    // Predicated region
    $region18: #{tpu_custom_call.1} parent=1 // pred_check
      %p29 = pneg %p28
    $region19: #{tpu_custom_call.1} parent=1 // pred_check_branch
      %31 = sbr.rel (%p29) target = $region21
    $region20: #{tpu_custom_call.1} parent=1 // pred_region
      %v32 = vld [vmem:[%s0] sm:$0xff]
      %v33 = vmul.f32 %v32, %v32
      %vm34 = vcmask 261120
      %v35 = vsel %vm34, %v33, 0.0
      %36 = vadd.xlane.f32.xlu0 %v35
      %v37 = vpop.xlane.xlu0 %36
      %v38 = vmax.f32 %v37, 1e-24
      %v39 = vrsqrt.pop %v38
      %v40 = vmul.f32 %v32, %v39
      %41 = vst.msk [vmem:[#allocation2] sm:$0xff] %vm34, %v40
      %vm42 = vcmask 7168
      %43 = vst.msk [vmem:[#allocation3] sm:$0xff] %vm42, -inf
      %44 = vst.msk [vmem:[#allocation4] sm:$0xff] %vm42, 0.0
      %45 = vst.msk [vmem:[#allocation5] sm:$0xff] %vm42, 0.0
    $region21: #{tpu_custom_call.1} parent=1 // pred_fallthru
      _
    %v46 = vld [vmem:[#allocation6] sm:$0xff]
    %v47 = vld [vmem:[#allocation6 + $0x8] sm:$0xff]
    %v48 = vmul.f32 %v46, %v46
    %v49 = vmul.f32 %v47, %v47
    %vm50 = vcmask 261120
    %v51 = vsel %vm50, %v48, 0.0
    %52 = vadd.xlane.f32.xlu0 %v51
    %v53 = vpop.xlane.xlu0 %52
    %v54 = vsel %vm50, %v49, 0.0
    %55 = vadd.xlane.f32.xlu0 %v54
    %v56 = vpop.xlane.xlu0 %55
    %v57 = vmax.f32 %v53, 1e-24
    %v58 = vmax.f32 %v56, 1e-24
    %v59 = vrsqrt.pop %v57
    %v60 = vrsqrt.pop %v58
    %v61 = vmul.f32 %v46, %v59
    %v62 = vmul.f32 %v47, %v60
    %v63 = vld [vmem:[#allocation2] sm:$0xff]
    %v65 = vsel %vm50, %v63, 0
    %v68 = vsel %vm50, %v61, 0
    %v71 = vsel %vm50, %v62, 0
    %73 = vmatprep.subr.mxu0 0.0
    %74 = vmatpush1.xpose.msra.mxu0 0.0
    %75 = vmatprep.subr.mxu0 0.0
    %76 = vmatpush1.xpose.msra.mxu0 0.0
    %77 = vmatprep.subr.mxu0 0.0
    %78 = vmatpush1.xpose.msra.mxu0 0.0
    %79 = vmatprep.subr.mxu0 0.0
    %80 = vmatpush1.xpose.msra.mxu0 0.0
    %81 = vmatprep.subr.mxu0 0.0
    %82 = vmatpush1.xpose.msra.mxu0 0.0
    %83 = vmatprep.subr.mxu0 0.0
    %84 = vmatpush1.xpose.msra.mxu0 0.0
    %85 = vmatprep.subr.mxu0 0.0
    %86 = vmatpush1.xpose.msra.mxu0 0.0
    %87 = vmatprep.subr.mxu0 0.0
    %88 = vmatpush1.xpose.msra.mxu0 0.0
    %89 = vmatprep.subr.mxu0 0.0
    %90 = vmatpush1.xpose.msra.mxu0 0.0
    %91 = vmatprep.subr.mxu0 0.0
    %92 = vmatpush1.xpose.msra.mxu0 0.0
    %93 = vmatprep.subr.mxu0 0.0
    %94 = vmatpush1.xpose.msra.mxu0 0.0
    %95 = vmatprep.subr.mxu0 0.0
    %96 = vmatpush1.xpose.msra.mxu0 0.0
    %97 = vmatprep.subr.mxu0 0.0
    %98 = vmatpush1.xpose.msra.mxu0 0.0
    %99 = vmatprep.subr.mxu0 0.0
    %100 = vmatpush1.xpose.msra.mxu0 0.0
    %101 = vmatprep.subr.mxu0 0.0
    %102 = vmatpush1.xpose.msra.mxu0 %v71
    %103 = vmatprep.subr.mxu0 0.0
    %104 = vmatpush1.xpose.msra.mxu0 %v68
    %105 = vmatprep.subr.mxu0 0.0
    %106 = vmatpush2.xpose.msra.mxu0 0.0
    %107 = vmatprep.subr.mxu0 0.0
    %108 = vmatpush2.xpose.msra.mxu0 0.0
    %109 = vmatprep.subr.mxu0 0.0
    %110 = vmatpush2.xpose.msra.mxu0 0.0
    %111 = vmatprep.subr.mxu0 0.0
    %112 = vmatpush2.xpose.msra.mxu0 0.0
    %113 = vmatprep.subr.mxu0 0.0
    %114 = vmatpush2.xpose.msra.mxu0 0.0
    %115 = vmatprep.subr.mxu0 0.0
    %116 = vmatpush2.xpose.msra.mxu0 0.0
    %117 = vmatprep.subr.mxu0 0.0
    %118 = vmatpush2.xpose.msra.mxu0 0.0
    %119 = vmatprep.subr.mxu0 0.0
    %120 = vmatpush2.xpose.msra.mxu0 0.0
    %121 = vmatprep.subr.mxu0 0.0
    %122 = vmatpush2.xpose.msra.mxu0 0.0
    %123 = vmatprep.subr.mxu0 0.0
    %124 = vmatpush2.xpose.msra.mxu0 0.0
    %125 = vmatprep.subr.mxu0 0.0
    %126 = vmatpush2.xpose.msra.mxu0 0.0
    %127 = vmatprep.subr.mxu0 0.0
    %128 = vmatpush2.xpose.msra.mxu0 0.0
    %129 = vmatprep.subr.mxu0 0.0
    %130 = vmatpush2.xpose.msra.mxu0 0.0
    %131 = vmatprep.subr.mxu0 0.0
    %132 = vmatpush2.xpose.msra.mxu0 0.0
    %133 = vmatprep.subr.mxu0 0.0
    %134 = vmatpush2.xpose.msra.mxu0 0.0
    %135 = vmatprep.subr.mxu0 0.0
    %136 = vmatpush2.xpose.msra.mxu0 0.0
    %137 = vmatprep.mubr.f32.mxu0 0.0
    %138 = vmatmul.mubr.f32.gmra.mxu0 %v65
    %v139 = vpop.f32.mrf.mxu0
    %v140 = vadd.f32 0.0, %v139
    %v141 = vpop.f32.mrf.mxu0
    %142 = vdwg.mxu0
    %v143 = vmul.f32 %v140, %v140
    %v144 = vsub.f32 1.0, %v143
    %v145 = vmax.f32 %v144, 0.0
    %v146 = vmin.f32 %v145, 1.0
    %v147 = vrsqrt.pop %v146
    %v148 = vmul.f32 %v146, %v147
    %vm149 = vcmp.eq.f32.partialorder %v146, inf
    %v150 = vsel %vm149, %v146, %v148
    %vm151 = vcmp.eq.f32.partialorder %v146, 0.0
    %v152 = vand.u32 %v146, 2147483648
    %v153 = vsel %vm151, %v152, %v150
    %v154 = vmul.f32 %v140, 0.9800666
    %v155 = vmul.f32 %v153, 0.19866933
    %v156 = vsub.f32 %v154, %v155
    %vm157 = vcmp.gt.f32.partialorder %v140, -0.9800666
    %v158 = vsub.f32 %v140, 0.039733864
    %v159 = vsel %vm157, %v156, %v158
    %v160 = vld [vmem:[%s2] sm:$0xff]
    %v161 = vlaneseq
    %v162 = vand.u32 %v161, 127
    %s163 = smul.u32 0, 16
    %v164 = vstv %s163
    %v165 = vadd.s32 %v162, %v164
    %166 = vset.pattern.permute.xlu0 0
    %167 = vperm.xlu0 %166, %v160
    %v168 = vpop.permute.xlu0 %167
    %vm169 = vcmp.eq.s32.totalorder %v165, %v168
    %v170 = vsel %vm169, %v159, %v140
    %v171 = vmul.f32 %v170, 30.0
    %v172 = vld [vmem:[#allocation5] sm:$0xff]
    %v173 = vsel %vm169, %v171, 0.0
    %vm174 = vcmask 130048
    %v175 = vsel %vm174, %v173, 0.0
    %176 = vadd.xlane.f32.xlu0 %v175
    %v177 = vpop.xlane.xlu0 %176
    %v178 = vadd.f32 %v172, %v177
    %vm179 = vcmask 7168
    %180 = vst.msk [vmem:[#allocation5] sm:$0xff] %vm179, %v178
    %v181 = vld [vmem:[#allocation3] sm:$0xff]
    %v182 = vsel %vm174, %v171, -inf
    %183 = vmax.xlane.f32.xlu0 %v182
    %v184 = vpop.xlane.xlu0 %183
    %v185 = vmax.f32 %v181, %v184
    %v186 = vsub.f32 %v181, %v185
    %v187 = vmul.f32 %v186, 1.442695
    %v188 = vpow.pop %v187
    %v189 = vld [vmem:[#allocation4] sm:$0xff]
    %v190 = vmul.f32 %v188, %v189
    %192 = vset.pattern.permute.xlu0 0
    %193 = vperm.xlu0 %192, %v185
    %v194 = vpop.permute.xlu0 %193
    %v196 = vsub.f32 %v171, %v194
    %v197 = vmul.f32 %v196, 1.442695
    %v198 = vpow.pop %v197
    %v199 = vsel %vm174, %v198, 0.0
    %200 = vadd.xlane.f32.xlu0 %v199
    %v201 = vpop.xlane.xlu0 %200
    %v202 = vadd.f32 %v190, %v201
    %203 = vst.msk [vmem:[#allocation4] sm:$0xff] %vm179, %v202
    %204 = vst.msk [vmem:[#allocation3] sm:$0xff] %vm179, %v185
    // Predicated region
    $region22: #{tpu_custom_call.1} parent=1 // pred_check
      %p205 = pneg %p28
    $region23: #{tpu_custom_call.1} parent=1 // pred_check_branch
      %207 = sbr.rel (%p205) target = $region25
    $region24: #{tpu_custom_call.1} parent=1 // pred_region
      %v208 = vld [vmem:[#allocation3] sm:$0xff]
      %v209 = vld [vmem:[#allocation4] sm:$0xff]
      %v210 = vlog2.pop %v209
      %v211 = vmul.f32 %v210, 0.6931472
      %v212 = vadd.f32 %v208, %v211
      %v213 = vld [vmem:[#allocation5] sm:$0xff]
      %v214 = vsub.f32 %v212, %v213
      %215 = vst.msk [vmem:[%s3] sm:$0xff] %vm179, %v214
    $region25: #{tpu_custom_call.1} parent=1 // pred_fallthru
      _
    // Predicated region
    $region26: #{tpu_custom_call.1} parent=1 // pred_check
      _
    $region27: #{tpu_custom_call.1} parent=1 // pred_check_branch
      %217 = sbr.rel (0) target = $region29
    $region28: #{tpu_custom_call.1} parent=1 // pred_region
      _
    $region29: #{tpu_custom_call.1} parent=1 // pred_fallthru
      _
    // Predicated region
    $region30: #{tpu_custom_call.1} parent=1 // pred_check
      _
    $region31: #{tpu_custom_call.1} parent=1 // pred_check_branch
      %219 = sbr.rel (0) target = $region33
    $region32: #{tpu_custom_call.1} parent=1 // pred_region
      _
    $region33: #{tpu_custom_call.1} parent=1 // pred_fallthru
      _
    %220 = vsyncpa [#allocation7], 1

</llo_original>
